<compile_context>
chip_gen: v6e
topology: v6e:2x2x1
jax: 0.10.0
libtpu: 0.0.40
codegen_flags: <defaults>
</compile_context>

<pallas_src>
import math
import jax
import jax.numpy as jnp
from jax.experimental import pallas as pl
from jax.experimental.pallas import tpu as pltpu


_VMEM = pl.BlockSpec(memory_space=pltpu.MemorySpace.VMEM)


# ------------------------------ fused kernel ----------------------------------

def _rgcn_fused_kernel(a_ref, w1_ref, root1_ref, bias1_ref,
                       w2_ref, root2_ref, bias2_ref, o_ref):
    # a_ref    : (R, N, N)   bf16   A[r, dst, src] = accumulated edge norms
    # w1_ref   : (R, N, H)   bf16   conv1 relation weights (in_channels == N)
    # root1_ref: (N, H)      f32
    # bias1_ref: (1, H)      f32
    # w2_ref   : (R, H, Cp)  bf16   conv2 relation weights, class dim padded to Cp
    # root2_ref: (H, Cp)     bf16   zero-padded
    # bias2_ref: (1, Cp)     f32    padded lanes carry -1e30
    # o_ref    : (N, Cp)     f32    log_softmax output (lane-dense)
    R, N, _ = a_ref.shape
    H = w1_ref.shape[2]

    a = a_ref[...]                                   # (R, N, N) bf16, one load

    # ---- conv1 (featureless) + relu ------------------------------------------
    # agg1 = sum_r A_r @ W1_r  (f32 accumulation in vregs)
    agg1 = root1_ref[...] + bias1_ref[...]           # (N, H) f32
    for r in range(R):
        agg1 = agg1 + jnp.dot(a[r], w1_ref[r],
                              preferred_element_type=jnp.float32)
    x1_b = jnp.maximum(agg1, 0.0).astype(jnp.bfloat16)   # only bf16 x1 stays live

    # ---- conv2, reassociated: agg2 = sum_r (A_r @ x1) @ W2_r -------------------
    # Running sum kept in f32 vregs; no VMEM scratch, no masked narrow stores.
    acc = jnp.dot(x1_b, root2_ref[...],
                  preferred_element_type=jnp.float32) + bias2_ref[...]   # (N, Cp)
    for r in range(R):
        y_r = jnp.dot(a[r], x1_b, preferred_element_type=jnp.float32)   # (N, H)
        acc = acc + jnp.dot(y_r.astype(jnp.bfloat16), w2_ref[r],
                            preferred_element_type=jnp.float32)

    # ---- log_softmax over classes (padded lanes have bias -1e30 -> ignored) ---
    m = jnp.max(acc, axis=1, keepdims=True)
    z = acc - m
    lse = jnp.log(jnp.sum(jnp.exp(z), axis=1, keepdims=True))
    o_ref[...] = z - lse


# ------------------------------ wrapper ----------------------------------------

def rgcn_forward(params, A):
    """A: (R, N, N) dense relational adjacency of accumulated edge norms."""
    p1, p2 = params["conv1"], params["conv2"]
    R, B = p1["att"].shape
    N, Hdim = p1["root"].shape          # in_channels(conv1) == num_nodes
    Hdim2, C_out = p2["root"].shape
    assert Hdim == Hdim2
    assert A.shape == (R, N, N), "featureless layer requires in_channels == num_nodes"

    # Lane-dense class dim: pad C_out up to a multiple of 128.
    Cpad = ((C_out + 127) // 128) * 128
    pad_c = Cpad - C_out

    # Basis combination: tiny (K=30, unaligned) -> plain XLA.
    w1 = (p1["att"] @ p1["basis"].reshape(B, -1)).reshape(R, N, Hdim)
    w2 = (p2["att"] @ p2["basis"].reshape(B, -1)).reshape(R, Hdim, C_out)

    w2p = jnp.pad(w2, ((0, 0), (0, 0), (0, pad_c))).astype(jnp.bfloat16)
    root2p = jnp.pad(p2["root"], ((0, 0), (0, pad_c))).astype(jnp.bfloat16)
    bias2p = jnp.concatenate(
        [p2["bias"], jnp.full((pad_c,), -1e30, jnp.float32)]).reshape(1, Cpad)

    flops = (2 * R * N * N * Hdim           # conv1
             + 2 * R * N * N * Hdim         # conv2: A_r @ x1
             + 2 * R * N * Hdim * Cpad      # conv2: y_r @ W2_r
             + 2 * N * Hdim * Cpad)         # root2 skip
    transcendentals = N * (Cpad + 1)
    bytes_accessed = (R * N * N * 2 + R * N * Hdim * 2 + N * Hdim * 4 + Hdim * 4
                      + R * Hdim * Cpad * 2 + Hdim * Cpad * 2 + Cpad * 4
                      + N * Cpad * 4)

    out_padded = pl.pallas_call(
        _rgcn_fused_kernel,
        out_shape=jax.ShapeDtypeStruct((N, Cpad), jnp.float32),
        in_specs=[_VMEM] * 7,
        out_specs=_VMEM,
        compiler_params=pltpu.CompilerParams(vmem_limit_bytes=32 * 1024 * 1024),
        cost_estimate=pl.CostEstimate(flops=flops,
                                      transcendentals=transcendentals,
                                      bytes_accessed=bytes_accessed),
    )(
        A.astype(jnp.bfloat16),
        w1.astype(jnp.bfloat16),
        p1["root"],
        p1["bias"].reshape(1, Hdim),
        w2p,
        root2p,
        bias2p,
    )
    return out_padded[:, :C_out]


# ------------------------------ graph densification ----------------------------
# TODO(synk): edge-list scatter-add densification has no clean Pallas equivalent;
#             it stays in plain XLA (.at[].add).  Single scatter, no relayout.

def build_dense_adjacency(src, dst, etype, norm, num_nodes, num_relations):
    A = jnp.zeros((num_relations, num_nodes, num_nodes), jnp.float32)
    A = A.at[etype, dst, src].add(norm)
    return A.astype(jnp.bfloat16)


# --------------------------- reference (plain JAX, f32) -------------------------

def reference_forward(params, src, dst, etype, norm, num_nodes):
    p1, p2 = params["conv1"], params["conv2"]
    R, B = p1["att"].shape

    Cin1, Cout1 = p1["root"].shape
    w1 = (p1["att"] @ p1["basis"].reshape(B, -1)).reshape(R, Cin1, Cout1)
    w1_flat = w1.reshape(-1, Cout1)
    idx = etype * Cin1 + src
    m1 = w1_flat[idx] * norm[:, None]
    agg1 = jnp.zeros((num_nodes, Cout1), jnp.float32).at[dst].add(m1)
    x = jnp.maximum(agg1 + p1["root"] + p1["bias"], 0.0)

    Cin2, Cout2 = p2["root"].shape
    w2 = (p2["att"] @ p2["basis"].reshape(B, -1)).reshape(R, Cin2, Cout2)
    m2 = jnp.einsum("ec,ecd->ed", x[src], w2[etype]) * norm[:, None]
    agg2 = jnp.zeros((num_nodes, Cout2), jnp.float32).at[dst].add(m2)
    out = agg2 + x @ p2["root"] + p2["bias"]
    return jax.nn.log_softmax(out, axis=1)


# ------------------------------ param init -------------------------------------

def _uniform_param(key, shape, size):
    bound = 1.0 / math.sqrt(size)
    return jax.random.uniform(key, shape, jnp.float32, -bound, bound)


def init_rgcn_conv(key, in_c, out_c, num_rel, num_bases):
    size = num_bases * in_c  # matches uniform(size, tensor) in the PyTorch module
    kb, ka, kr, kbias = jax.random.split(key, 4)
    return dict(
        basis=_uniform_param(kb, (num_bases, in_c, out_c), size),
        att=_uniform_param(ka, (num_rel, num_bases), size),
        root=_uniform_param(kr, (in_c, out_c), size),
        bias=_uniform_param(kbias, (out_c,), size),
    )


# ---------------------------------- main ----------------------------------------

if __name__ == "__main__":
    # Small synthetic graph. NOTE: featureless first layer requires
    # in_channels == num_nodes (DGL entity-classification setup).
    NUM_NODES = 16      # == in_channels of conv1
    NUM_EDGES = 48
    NUM_RELATIONS = 4
    HIDDEN = 16         # fixed to 16 by RGCN.__init__
    OUT_CHANNELS = 8
    NUM_BASES = 30      # fixed to 30 by RGCN.__init__

    key = jax.random.PRNGKey(0)
    k_src, k_dst, k_typ, k_nrm, k_p1, k_p2 = jax.random.split(key, 6)

    src = jax.random.randint(k_src, (NUM_EDGES,), 0, NUM_NODES)
    dst = jax.random.randint(k_dst, (NUM_EDGES,), 0, NUM_NODES)
    etype = jax.random.randint(k_typ, (NUM_EDGES,), 0, NUM_RELATIONS)
    norm = jax.random.uniform(k_nrm, (NUM_EDGES,), jnp.float32, 0.1, 1.0)

    params = dict(
        conv1=init_rgcn_conv(k_p1, NUM_NODES, HIDDEN, NUM_RELATIONS, NUM_BASES),
        conv2=init_rgcn_conv(k_p2, HIDDEN, OUT_CHANNELS, NUM_RELATIONS, NUM_BASES),
    )

    A = build_dense_adjacency(src, dst, etype, norm, NUM_NODES, NUM_RELATIONS)

    out = jax.jit(rgcn_forward)(params, A)
    out = jax.block_until_ready(out)

    ref = reference_forward(params, src, dst, etype, norm, NUM_NODES)
    assert out.shape == (NUM_NODES, OUT_CHANNELS)
    # bf16 adjacency / weight streaming (f32 accumulation) -> slightly looser tol.
    assert jnp.allclose(out, ref, rtol=1e-2, atol=1e-2), "mismatch vs reference"

    print("KERNEL_OK")
</pallas_src>

<mosaic_0001>
module attributes {stable_mosaic.version = 11 : i64} {
  func.func @_rgcn_fused_kernel(%arg0: memref<4x16x16xbf16, #tpu.memory_space<vmem>>, %arg1: memref<4x16x16xbf16, #tpu.memory_space<vmem>>, %arg2: memref<16x16xf32, #tpu.memory_space<vmem>>, %arg3: memref<1x16xf32, #tpu.memory_space<vmem>>, %arg4: memref<4x16x128xbf16, #tpu.memory_space<vmem>>, %arg5: memref<16x128xbf16, #tpu.memory_space<vmem>>, %arg6: memref<1x128xf32, #tpu.memory_space<vmem>>, %arg7: memref<16x128xf32, #tpu.memory_space<vmem>>) attributes {dimension_semantics = [], scalar_prefetch = 0 : i64, scratch_operands = 0 : i64, tpu.core_type = #tpu.core_type<tc>} {
    %c0 = arith.constant 0 : index
    %c0_0 = arith.constant 0 : index
    %c0_1 = arith.constant 0 : index
    %0 = vector.load %arg0[%c0, %c0_0, %c0_1] : memref<4x16x16xbf16, #tpu.memory_space<vmem>>, vector<4x16x16xbf16>
    %c0_2 = arith.constant 0 : index
    %c0_3 = arith.constant 0 : index
    %1 = vector.load %arg2[%c0_2, %c0_3] : memref<16x16xf32, #tpu.memory_space<vmem>>, vector<16x16xf32>
    %c0_4 = arith.constant 0 : index
    %c0_5 = arith.constant 0 : index
    %2 = vector.load %arg3[%c0_4, %c0_5] : memref<1x16xf32, #tpu.memory_space<vmem>>, vector<1x16xf32>
    %3 = vector.broadcast %2 : vector<1x16xf32> to vector<16x16xf32>
    %4 = arith.addf %1, %3 : vector<16x16xf32>
    %5 = vector.extract_strided_slice %0 {offsets = [0, 0, 0], sizes = [1, 16, 16], strides = [1, 1, 1]} : vector<4x16x16xbf16> to vector<1x16x16xbf16>
    %6 = vector.shape_cast %5 : vector<1x16x16xbf16> to vector<16x16xbf16>
    %c0_6 = arith.constant 0 : index
    %c0_7 = arith.constant 0 : index
    %c0_8 = arith.constant 0 : index
    %7 = vector.load %arg1[%c0_6, %c0_7, %c0_8] : memref<4x16x16xbf16, #tpu.memory_space<vmem>>, vector<1x16x16xbf16>
    %8 = vector.shape_cast %7 : vector<1x16x16xbf16> to vector<16x16xbf16>
    %cst = arith.constant dense<0.000000e+00> : vector<16x16xf32>
    %9 = tpu.matmul %6, %8, %cst {dimension_numbers = #tpu.dot_dimension_numbers<[1], [0], [0], [1], [0, 0, 1, 1], [], []>} : vector<16x16xbf16>, vector<16x16xbf16>, vector<16x16xf32> -> vector<16x16xf32>
    %10 = arith.addf %4, %9 : vector<16x16xf32>
    %11 = vector.extract_strided_slice %0 {offsets = [1, 0, 0], sizes = [1, 16, 16], strides = [1, 1, 1]} : vector<4x16x16xbf16> to vector<1x16x16xbf16>
    %12 = vector.shape_cast %11 : vector<1x16x16xbf16> to vector<16x16xbf16>
    %c1 = arith.constant 1 : index
    %c0_9 = arith.constant 0 : index
    %c0_10 = arith.constant 0 : index
    %13 = vector.load %arg1[%c1, %c0_9, %c0_10] : memref<4x16x16xbf16, #tpu.memory_space<vmem>>, vector<1x16x16xbf16>
    %14 = vector.shape_cast %13 : vector<1x16x16xbf16> to vector<16x16xbf16>
    %cst_11 = arith.constant dense<0.000000e+00> : vector<16x16xf32>
    %15 = tpu.matmul %12, %14, %cst_11 {dimension_numbers = #tpu.dot_dimension_numbers<[1], [0], [0], [1], [0, 0, 1, 1], [], []>} : vector<16x16xbf16>, vector<16x16xbf16>, vector<16x16xf32> -> vector<16x16xf32>
    %16 = arith.addf %10, %15 : vector<16x16xf32>
    %17 = vector.extract_strided_slice %0 {offsets = [2, 0, 0], sizes = [1, 16, 16], strides = [1, 1, 1]} : vector<4x16x16xbf16> to vector<1x16x16xbf16>
    %18 = vector.shape_cast %17 : vector<1x16x16xbf16> to vector<16x16xbf16>
    %c2 = arith.constant 2 : index
    %c0_12 = arith.constant 0 : index
    %c0_13 = arith.constant 0 : index
    %19 = vector.load %arg1[%c2, %c0_12, %c0_13] : memref<4x16x16xbf16, #tpu.memory_space<vmem>>, vector<1x16x16xbf16>
    %20 = vector.shape_cast %19 : vector<1x16x16xbf16> to vector<16x16xbf16>
    %cst_14 = arith.constant dense<0.000000e+00> : vector<16x16xf32>
    %21 = tpu.matmul %18, %20, %cst_14 {dimension_numbers = #tpu.dot_dimension_numbers<[1], [0], [0], [1], [0, 0, 1, 1], [], []>} : vector<16x16xbf16>, vector<16x16xbf16>, vector<16x16xf32> -> vector<16x16xf32>
    %22 = arith.addf %16, %21 : vector<16x16xf32>
    %23 = vector.extract_strided_slice %0 {offsets = [3, 0, 0], sizes = [1, 16, 16], strides = [1, 1, 1]} : vector<4x16x16xbf16> to vector<1x16x16xbf16>
    %24 = vector.shape_cast %23 : vector<1x16x16xbf16> to vector<16x16xbf16>
    %c3 = arith.constant 3 : index
    %c0_15 = arith.constant 0 : index
    %c0_16 = arith.constant 0 : index
    %25 = vector.load %arg1[%c3, %c0_15, %c0_16] : memref<4x16x16xbf16, #tpu.memory_space<vmem>>, vector<1x16x16xbf16>
    %26 = vector.shape_cast %25 : vector<1x16x16xbf16> to vector<16x16xbf16>
    %cst_17 = arith.constant dense<0.000000e+00> : vector<16x16xf32>
    %27 = tpu.matmul %24, %26, %cst_17 {dimension_numbers = #tpu.dot_dimension_numbers<[1], [0], [0], [1], [0, 0, 1, 1], [], []>} : vector<16x16xbf16>, vector<16x16xbf16>, vector<16x16xf32> -> vector<16x16xf32>
    %28 = arith.addf %22, %27 : vector<16x16xf32>
    %cst_18 = arith.constant 0.000000e+00 : f32
    %29 = vector.broadcast %cst_18 : f32 to vector<16x16xf32>
    %30 = arith.maximumf %28, %29 : vector<16x16xf32>
    %31 = arith.truncf %30 : vector<16x16xf32> to vector<16x16xbf16>
    %c0_19 = arith.constant 0 : index
    %c0_20 = arith.constant 0 : index
    %32 = vector.load %arg5[%c0_19, %c0_20] : memref<16x128xbf16, #tpu.memory_space<vmem>>, vector<16x128xbf16>
    %cst_21 = arith.constant dense<0.000000e+00> : vector<16x128xf32>
    %33 = tpu.matmul %31, %32, %cst_21 {dimension_numbers = #tpu.dot_dimension_numbers<[1], [0], [0], [1], [0, 0, 1, 1], [], []>} : vector<16x16xbf16>, vector<16x128xbf16>, vector<16x128xf32> -> vector<16x128xf32>
    %c0_22 = arith.constant 0 : index
    %c0_23 = arith.constant 0 : index
    %34 = vector.load %arg6[%c0_22, %c0_23] : memref<1x128xf32, #tpu.memory_space<vmem>>, vector<1x128xf32>
    %35 = vector.broadcast %34 : vector<1x128xf32> to vector<16x128xf32>
    %36 = arith.addf %33, %35 : vector<16x128xf32>
    %37 = vector.extract_strided_slice %0 {offsets = [0, 0, 0], sizes = [1, 16, 16], strides = [1, 1, 1]} : vector<4x16x16xbf16> to vector<1x16x16xbf16>
    %38 = vector.shape_cast %37 : vector<1x16x16xbf16> to vector<16x16xbf16>
    %cst_24 = arith.constant dense<0.000000e+00> : vector<16x16xf32>
    %39 = tpu.matmul %38, %31, %cst_24 {dimension_numbers = #tpu.dot_dimension_numbers<[1], [0], [0], [1], [0, 0, 1, 1], [], []>} : vector<16x16xbf16>, vector<16x16xbf16>, vector<16x16xf32> -> vector<16x16xf32>
    %40 = arith.truncf %39 : vector<16x16xf32> to vector<16x16xbf16>
    %c0_25 = arith.constant 0 : index
    %c0_26 = arith.constant 0 : index
    %c0_27 = arith.constant 0 : index
    %41 = vector.load %arg4[%c0_25, %c0_26, %c0_27] : memref<4x16x128xbf16, #tpu.memory_space<vmem>>, vector<1x16x128xbf16>
    %42 = vector.shape_cast %41 : vector<1x16x128xbf16> to vector<16x128xbf16>
    %cst_28 = arith.constant dense<0.000000e+00> : vector<16x128xf32>
    %43 = tpu.matmul %40, %42, %cst_28 {dimension_numbers = #tpu.dot_dimension_numbers<[1], [0], [0], [1], [0, 0, 1, 1], [], []>} : vector<16x16xbf16>, vector<16x128xbf16>, vector<16x128xf32> -> vector<16x128xf32>
    %44 = arith.addf %36, %43 : vector<16x128xf32>
    %45 = vector.extract_strided_slice %0 {offsets = [1, 0, 0], sizes = [1, 16, 16], strides = [1, 1, 1]} : vector<4x16x16xbf16> to vector<1x16x16xbf16>
    %46 = vector.shape_cast %45 : vector<1x16x16xbf16> to vector<16x16xbf16>
    %cst_29 = arith.constant dense<0.000000e+00> : vector<16x16xf32>
    %47 = tpu.matmul %46, %31, %cst_29 {dimension_numbers = #tpu.dot_dimension_numbers<[1], [0], [0], [1], [0, 0, 1, 1], [], []>} : vector<16x16xbf16>, vector<16x16xbf16>, vector<16x16xf32> -> vector<16x16xf32>
    %48 = arith.truncf %47 : vector<16x16xf32> to vector<16x16xbf16>
    %c1_30 = arith.constant 1 : index
    %c0_31 = arith.constant 0 : index
    %c0_32 = arith.constant 0 : index
    %49 = vector.load %arg4[%c1_30, %c0_31, %c0_32] : memref<4x16x128xbf16, #tpu.memory_space<vmem>>, vector<1x16x128xbf16>
    %50 = vector.shape_cast %49 : vector<1x16x128xbf16> to vector<16x128xbf16>
    %cst_33 = arith.constant dense<0.000000e+00> : vector<16x128xf32>
    %51 = tpu.matmul %48, %50, %cst_33 {dimension_numbers = #tpu.dot_dimension_numbers<[1], [0], [0], [1], [0, 0, 1, 1], [], []>} : vector<16x16xbf16>, vector<16x128xbf16>, vector<16x128xf32> -> vector<16x128xf32>
    %52 = arith.addf %44, %51 : vector<16x128xf32>
    %53 = vector.extract_strided_slice %0 {offsets = [2, 0, 0], sizes = [1, 16, 16], strides = [1, 1, 1]} : vector<4x16x16xbf16> to vector<1x16x16xbf16>
    %54 = vector.shape_cast %53 : vector<1x16x16xbf16> to vector<16x16xbf16>
    %cst_34 = arith.constant dense<0.000000e+00> : vector<16x16xf32>
    %55 = tpu.matmul %54, %31, %cst_34 {dimension_numbers = #tpu.dot_dimension_numbers<[1], [0], [0], [1], [0, 0, 1, 1], [], []>} : vector<16x16xbf16>, vector<16x16xbf16>, vector<16x16xf32> -> vector<16x16xf32>
    %56 = arith.truncf %55 : vector<16x16xf32> to vector<16x16xbf16>
    %c2_35 = arith.constant 2 : index
    %c0_36 = arith.constant 0 : index
    %c0_37 = arith.constant 0 : index
    %57 = vector.load %arg4[%c2_35, %c0_36, %c0_37] : memref<4x16x128xbf16, #tpu.memory_space<vmem>>, vector<1x16x128xbf16>
    %58 = vector.shape_cast %57 : vector<1x16x128xbf16> to vector<16x128xbf16>
    %cst_38 = arith.constant dense<0.000000e+00> : vector<16x128xf32>
    %59 = tpu.matmul %56, %58, %cst_38 {dimension_numbers = #tpu.dot_dimension_numbers<[1], [0], [0], [1], [0, 0, 1, 1], [], []>} : vector<16x16xbf16>, vector<16x128xbf16>, vector<16x128xf32> -> vector<16x128xf32>
    %60 = arith.addf %52, %59 : vector<16x128xf32>
    %61 = vector.extract_strided_slice %0 {offsets = [3, 0, 0], sizes = [1, 16, 16], strides = [1, 1, 1]} : vector<4x16x16xbf16> to vector<1x16x16xbf16>
    %62 = vector.shape_cast %61 : vector<1x16x16xbf16> to vector<16x16xbf16>
    %cst_39 = arith.constant dense<0.000000e+00> : vector<16x16xf32>
    %63 = tpu.matmul %62, %31, %cst_39 {dimension_numbers = #tpu.dot_dimension_numbers<[1], [0], [0], [1], [0, 0, 1, 1], [], []>} : vector<16x16xbf16>, vector<16x16xbf16>, vector<16x16xf32> -> vector<16x16xf32>
    %64 = arith.truncf %63 : vector<16x16xf32> to vector<16x16xbf16>
    %c3_40 = arith.constant 3 : index
    %c0_41 = arith.constant 0 : index
    %c0_42 = arith.constant 0 : index
    %65 = vector.load %arg4[%c3_40, %c0_41, %c0_42] : memref<4x16x128xbf16, #tpu.memory_space<vmem>>, vector<1x16x128xbf16>
    %66 = vector.shape_cast %65 : vector<1x16x128xbf16> to vector<16x128xbf16>
    %cst_43 = arith.constant dense<0.000000e+00> : vector<16x128xf32>
    %67 = tpu.matmul %64, %66, %cst_43 {dimension_numbers = #tpu.dot_dimension_numbers<[1], [0], [0], [1], [0, 0, 1, 1], [], []>} : vector<16x16xbf16>, vector<16x128xbf16>, vector<16x128xf32> -> vector<16x128xf32>
    %68 = arith.addf %60, %67 : vector<16x128xf32>
    %cst_44 = arith.constant dense<0xFF800000> : vector<16xf32>
    %69 = vector.multi_reduction <maximumf>, %68, %cst_44 [1] : vector<16x128xf32> to vector<16xf32>
    %70 = vector.shape_cast %69 : vector<16xf32> to vector<16x1xf32>
    %71 = vector.broadcast %70 : vector<16x1xf32> to vector<16x128xf32>
    %72 = arith.subf %68, %71 : vector<16x128xf32>
    %73 = math.exp %72 : vector<16x128xf32>
    %cst_45 = arith.constant dense<0.000000e+00> : vector<16xf32>
    %74 = vector.multi_reduction <add>, %73, %cst_45 [1] : vector<16x128xf32> to vector<16xf32>
    %75 = vector.shape_cast %74 : vector<16xf32> to vector<16x1xf32>
    %76 = math.log %75 : vector<16x1xf32>
    %77 = vector.broadcast %76 : vector<16x1xf32> to vector<16x128xf32>
    %78 = arith.subf %72, %77 : vector<16x128xf32>
    %c0_46 = arith.constant 0 : index
    %c0_47 = arith.constant 0 : index
    %79 = vector.load %arg7[%c0_46, %c0_47] : memref<16x128xf32, #tpu.memory_space<vmem>>, vector<16x128xf32>
    tpu.vector_store %arg7[%c0_46, %c0_47], %78 {strides = array<i32>} : memref<16x128xf32, #tpu.memory_space<vmem>>, vector<16x128xf32>,
    return
  }
}

</mosaic_0001>

<llo_original>
// kernel: rgcn_forward.1
$region0: #{rgcn_forward.1}
  #allocation0 [shape = 'u32[]', space=smem, size = 0x4, offset = 0x4, fixed_abs, tag = 'smem constant byte address 0x4 - core index']
  #allocation1 [shape = 'u32[144,128]{1,0:T(1,128)}', space=vmem, size = 0x12000, scoped, tag = 'internal scratch']
  %s0 = inlined_call_operand.vmem [shape: bf16[4,16,16], index: 0, kind: input, shape index: {}]
  %s1 = inlined_call_operand.vmem [shape: bf16[4,16,16], index: 1, kind: input, shape index: {}]
  %s2 = inlined_call_operand.vmem [shape: f32[16,16], index: 2, kind: input, shape index: {}]
  %s3 = inlined_call_operand.vmem [shape: f32[1,16], index: 3, kind: input, shape index: {}]
  %s4 = inlined_call_operand.vmem [shape: bf16[4,16,128], index: 4, kind: input, shape index: {}]
  %s5 = inlined_call_operand.vmem [shape: bf16[16,128], index: 5, kind: input, shape index: {}]
  %s6 = inlined_call_operand.vmem [shape: f32[1,128], index: 6, kind: input, shape index: {}]
  %s7 = inlined_call_operand.vmem [shape: f32[16,128], index: 7, kind: output, shape index: {}]
  %s8 = sld [smem:[#allocation0]]
  $region38: #{rgcn_forward.1} parent=0
    _
  %s10 = ssub.s32 1, %s8
  %s11 = scalar_select 0, %s10, %s8
  // Predicated region
  $region2: #{rgcn_forward.1} parent=0 // pred_check
    _
  $region3: #{rgcn_forward.1} parent=0 // pred_check_branch
    %13 = sbr.rel (0) target = $region5
  $region4: #{rgcn_forward.1} parent=0 // pred_region
    _
  $region5: #{rgcn_forward.1} parent=0 // pred_fallthru
    _
  // Predicated region
  $region6: #{rgcn_forward.1} parent=0 // pred_check
    _
  $region7: #{rgcn_forward.1} parent=0 // pred_check_branch
    %15 = sbr.rel (0) target = $region9
  $region8: #{rgcn_forward.1} parent=0 // pred_region
    _
  $region9: #{rgcn_forward.1} parent=0 // pred_fallthru
    _
  // Predicated region
  $region10: #{rgcn_forward.1} parent=0 // pred_check
    _
  $region11: #{rgcn_forward.1} parent=0 // pred_check_branch
    %17 = sbr.rel (0) target = $region13
  $region12: #{rgcn_forward.1} parent=0 // pred_region
    _
  $region13: #{rgcn_forward.1} parent=0 // pred_fallthru
    _
  // Predicated region
  $region14: #{rgcn_forward.1} parent=0 // pred_check
    _
  $region15: #{rgcn_forward.1} parent=0 // pred_check_branch
    %19 = sbr.rel (0) target = $region17
  $region16: #{rgcn_forward.1} parent=0 // pred_region
    _
  $region17: #{rgcn_forward.1} parent=0 // pred_fallthru
    _
  // Predicated region
  $region18: #{rgcn_forward.1} parent=0 // pred_check
    _
  $region19: #{rgcn_forward.1} parent=0 // pred_check_branch
    %21 = sbr.rel (0) target = $region21
  $region20: #{rgcn_forward.1} parent=0 // pred_region
    _
  $region21: #{rgcn_forward.1} parent=0 // pred_fallthru
    _
  // Predicated region
  $region22: #{rgcn_forward.1} parent=0 // pred_check
    _
  $region23: #{rgcn_forward.1} parent=0 // pred_check_branch
    %23 = sbr.rel (0) target = $region25
  $region24: #{rgcn_forward.1} parent=0 // pred_region
    _
  $region25: #{rgcn_forward.1} parent=0 // pred_fallthru
    _
  // Predicated region
  $region26: #{rgcn_forward.1} parent=0 // pred_check
    _
  $region27: #{rgcn_forward.1} parent=0 // pred_check_branch
    %25 = sbr.rel (0) target = $region29
  $region28: #{rgcn_forward.1} parent=0 // pred_region
    _
  $region29: #{rgcn_forward.1} parent=0 // pred_fallthru
    _
  %v27 = vld [vmem:[%s0] sm:$0xf]
  %v28 = vld [vmem:[%s0 + $0x4] sm:$0xf]
  %v29 = vld [vmem:[%s0 + $0x8] sm:$0xf]
  %v30 = vld [vmem:[%s0 + $0xc] sm:$0xf]
  %v31 = vld [vmem:[%s0 + $0x10] sm:$0xf]
  %v32 = vld [vmem:[%s0 + $0x14] sm:$0xf]
  %v33 = vld [vmem:[%s0 + $0x18] sm:$0xf]
  %v34 = vld [vmem:[%s0 + $0x1c] sm:$0xf]
  %v35 = vld [vmem:[%s2] sm:$0xff]
  %v36 = vld [vmem:[%s2 + $0x8] sm:$0xff]
  %v37 = vld [vmem:[%s3] sm:$0x1]
  %v39 = vlaneseq
  %v40 = vshrl.u32 %v39, 7
  %v41 = vsub.s32 0, %v40
  %v42 = vrot.slane %v37, %v41
  %v44 = vadd.f32 %v35, %v42
  %v45 = vadd.f32 %v36, %v42
  %v46 = vld [vmem:[%s1] sm:$0xf]
  %v47 = vld [vmem:[%s1 + $0x4] sm:$0xf]
  %v50 = vunpack.c.l.b16 %v27
  %v51 = vunpack.c.l.b16 %v28
  %v52 = vpack.c.b16 %v51, %v50
  %v55 = vunpack.c.l.b16 %v46
  %v56 = vunpack.c.l.b16 %v47
  %v57 = vpack.c.b16 %v56, %v55
  %vm59 = vcmask 130048
  %v61 = vsel %vm59, %v52, 0
  %63 = vmatprep.subr.bf16.mxu0 0
  %64 = vmatpush1.bf16.msra.mxu0 0
  %65 = vmatprep.subr.bf16.mxu0 0
  %66 = vmatpush1.bf16.msra.mxu0 0
  %67 = vmatprep.subr.bf16.mxu0 0
  %68 = vmatpush1.bf16.msra.mxu0 0
  %69 = vmatprep.subr.bf16.mxu0 0
  %70 = vmatpush1.bf16.msra.mxu0 0
  %71 = vmatprep.subr.bf16.mxu0 0
  %72 = vmatpush1.bf16.msra.mxu0 0
  %73 = vmatprep.subr.bf16.mxu0 0
  %74 = vmatpush1.bf16.msra.mxu0 0
  %75 = vmatprep.subr.bf16.mxu0 0
  %76 = vmatpush1.bf16.msra.mxu0 0
  %77 = vmatprep.subr.bf16.mxu0 0
  %78 = vmatpush1.bf16.msra.mxu0 %v57
  %79 = vmatprep.subr.bf16.mxu0 0
  %80 = vmatpush2.bf16.msra.mxu0 0
  %81 = vmatprep.subr.bf16.mxu0 0
  %82 = vmatpush2.bf16.msra.mxu0 0
  %83 = vmatprep.subr.bf16.mxu0 0
  %84 = vmatpush2.bf16.msra.mxu0 0
  %85 = vmatprep.subr.bf16.mxu0 0
  %86 = vmatpush2.bf16.msra.mxu0 0
  %87 = vmatprep.subr.bf16.mxu0 0
  %88 = vmatpush2.bf16.msra.mxu0 0
  %89 = vmatprep.subr.bf16.mxu0 0
  %90 = vmatpush2.bf16.msra.mxu0 0
  %91 = vmatprep.subr.bf16.mxu0 0
  %92 = vmatpush2.bf16.msra.mxu0 0
  %93 = vmatprep.subr.bf16.mxu0 0
  %94 = vmatpush2.bf16.msra.mxu0 0
  %95 = vmatprep.mubr.bf16.mxu0 0
  %96 = vmatmul.mubr.bf16.gmra.mxu0 %v61
  %v97 = vpop.f32.mrf.mxu0
  %v98 = vadd.f32 0.0, %v97
  %v99 = vpop.f32.mrf.mxu0
  %v100 = vpop.f32.mrf.mxu0
  %v101 = vadd.f32 0.0, %v100
  %v102 = vpop.f32.mrf.mxu0
  %103 = vdwg.mxu0
  %v104 = vadd.f32 %v44, %v98
  %v105 = vadd.f32 %v45, %v101
  %s106 = scalar_lea.vmem %s1, 8
  %v107 = vld [vmem:[%s106] sm:$0xf]
  %v108 = vld [vmem:[%s106 + $0x4] sm:$0xf]
  %v111 = vunpack.c.l.b16 %v29
  %v112 = vunpack.c.l.b16 %v30
  %v113 = vpack.c.b16 %v112, %v111
  %v116 = vunpack.c.l.b16 %v107
  %v117 = vunpack.c.l.b16 %v108
  %v118 = vpack.c.b16 %v117, %v116
  %v121 = vsel %vm59, %v113, 0
  %123 = vmatprep.subr.bf16.mxu0 0
  %124 = vmatpush1.bf16.msra.mxu0 0
  %125 = vmatprep.subr.bf16.mxu0 0
  %126 = vmatpush1.bf16.msra.mxu0 0
  %127 = vmatprep.subr.bf16.mxu0 0
  %128 = vmatpush1.bf16.msra.mxu0 0
  %129 = vmatprep.subr.bf16.mxu0 0
  %130 = vmatpush1.bf16.msra.mxu0 0
  %131 = vmatprep.subr.bf16.mxu0 0
  %132 = vmatpush1.bf16.msra.mxu0 0
  %133 = vmatprep.subr.bf16.mxu0 0
  %134 = vmatpush1.bf16.msra.mxu0 0
  %135 = vmatprep.subr.bf16.mxu0 0
  %136 = vmatpush1.bf16.msra.mxu0 0
  %137 = vmatprep.subr.bf16.mxu0 0
  %138 = vmatpush1.bf16.msra.mxu0 %v118
  %139 = vmatprep.subr.bf16.mxu0 0
  %140 = vmatpush2.bf16.msra.mxu0 0
  %141 = vmatprep.subr.bf16.mxu0 0
  %142 = vmatpush2.bf16.msra.mxu0 0
  %143 = vmatprep.subr.bf16.mxu0 0
  %144 = vmatpush2.bf16.msra.mxu0 0
  %145 = vmatprep.subr.bf16.mxu0 0
  %146 = vmatpush2.bf16.msra.mxu0 0
  %147 = vmatprep.subr.bf16.mxu0 0
  %148 = vmatpush2.bf16.msra.mxu0 0
  %149 = vmatprep.subr.bf16.mxu0 0
  %150 = vmatpush2.bf16.msra.mxu0 0
  %151 = vmatprep.subr.bf16.mxu0 0
  %152 = vmatpush2.bf16.msra.mxu0 0
  %153 = vmatprep.subr.bf16.mxu0 0
  %154 = vmatpush2.bf16.msra.mxu0 0
  %155 = vmatprep.mubr.bf16.mxu0 0
  %156 = vmatmul.mubr.bf16.gmra.mxu0 %v121
  %v157 = vpop.f32.mrf.mxu0
  %v158 = vadd.f32 0.0, %v157
  %v159 = vpop.f32.mrf.mxu0
  %v160 = vpop.f32.mrf.mxu0
  %v161 = vadd.f32 0.0, %v160
  %v162 = vpop.f32.mrf.mxu0
  %163 = vdwg.mxu0
  %v164 = vadd.f32 %v104, %v158
  %v165 = vadd.f32 %v105, %v161
  %s166 = scalar_lea.vmem %s1, 16
  %v167 = vld [vmem:[%s166] sm:$0xf]
  %v168 = vld [vmem:[%s166 + $0x4] sm:$0xf]
  %v171 = vunpack.c.l.b16 %v31
  %v172 = vunpack.c.l.b16 %v32
  %v173 = vpack.c.b16 %v172, %v171
  %v176 = vunpack.c.l.b16 %v167
  %v177 = vunpack.c.l.b16 %v168
  %v178 = vpack.c.b16 %v177, %v176
  %v181 = vsel %vm59, %v173, 0
  %183 = vmatprep.subr.bf16.mxu0 0
  %184 = vmatpush1.bf16.msra.mxu0 0
  %185 = vmatprep.subr.bf16.mxu0 0
  %186 = vmatpush1.bf16.msra.mxu0 0
  %187 = vmatprep.subr.bf16.mxu0 0
  %188 = vmatpush1.bf16.msra.mxu0 0
  %189 = vmatprep.subr.bf16.mxu0 0
  %190 = vmatpush1.bf16.msra.mxu0 0
  %191 = vmatprep.subr.bf16.mxu0 0
  %192 = vmatpush1.bf16.msra.mxu0 0
  %193 = vmatprep.subr.bf16.mxu0 0
  %194 = vmatpush1.bf16.msra.mxu0 0
  %195 = vmatprep.subr.bf16.mxu0 0
  %196 = vmatpush1.bf16.msra.mxu0 0
  %197 = vmatprep.subr.bf16.mxu0 0
  %198 = vmatpush1.bf16.msra.mxu0 %v178
  %199 = vmatprep.subr.bf16.mxu0 0
  %200 = vmatpush2.bf16.msra.mxu0 0
  %201 = vmatprep.subr.bf16.mxu0 0
  %202 = vmatpush2.bf16.msra.mxu0 0
  %203 = vmatprep.subr.bf16.mxu0 0
  %204 = vmatpush2.bf16.msra.mxu0 0
  %205 = vmatprep.subr.bf16.mxu0 0
  %206 = vmatpush2.bf16.msra.mxu0 0
  %207 = vmatprep.subr.bf16.mxu0 0
  %208 = vmatpush2.bf16.msra.mxu0 0
  %209 = vmatprep.subr.bf16.mxu0 0
  %210 = vmatpush2.bf16.msra.mxu0 0
  %211 = vmatprep.subr.bf16.mxu0 0
  %212 = vmatpush2.bf16.msra.mxu0 0
  %213 = vmatprep.subr.bf16.mxu0 0
  %214 = vmatpush2.bf16.msra.mxu0 0
  %215 = vmatprep.mubr.bf16.mxu0 0
  %216 = vmatmul.mubr.bf16.gmra.mxu0 %v181
  %v217 = vpop.f32.mrf.mxu0
  %v218 = vadd.f32 0.0, %v217
  %v219 = vpop.f32.mrf.mxu0
  %v220 = vpop.f32.mrf.mxu0
  %v221 = vadd.f32 0.0, %v220
  %v222 = vpop.f32.mrf.mxu0
  %223 = vdwg.mxu0
  %v224 = vadd.f32 %v164, %v218
  %v225 = vadd.f32 %v165, %v221
  %s226 = scalar_lea.vmem %s1, 24
  %v227 = vld [vmem:[%s226] sm:$0xf]
  %v228 = vld [vmem:[%s226 + $0x4] sm:$0xf]
  %v231 = vunpack.c.l.b16 %v33
  %v232 = vunpack.c.l.b16 %v34
  %v233 = vpack.c.b16 %v232, %v231
  %v236 = vunpack.c.l.b16 %v227
  %v237 = vunpack.c.l.b16 %v228
  %v238 = vpack.c.b16 %v237, %v236
  %v241 = vsel %vm59, %v233, 0
  %243 = vmatprep.subr.bf16.mxu0 0
  %244 = vmatpush1.bf16.msra.mxu0 0
  %245 = vmatprep.subr.bf16.mxu0 0
  %246 = vmatpush1.bf16.msra.mxu0 0
  %247 = vmatprep.subr.bf16.mxu0 0
  %248 = vmatpush1.bf16.msra.mxu0 0
  %249 = vmatprep.subr.bf16.mxu0 0
  %250 = vmatpush1.bf16.msra.mxu0 0
  %251 = vmatprep.subr.bf16.mxu0 0
  %252 = vmatpush1.bf16.msra.mxu0 0
  %253 = vmatprep.subr.bf16.mxu0 0
  %254 = vmatpush1.bf16.msra.mxu0 0
  %255 = vmatprep.subr.bf16.mxu0 0
  %256 = vmatpush1.bf16.msra.mxu0 0
  %257 = vmatprep.subr.bf16.mxu0 0
  %258 = vmatpush1.bf16.msra.mxu0 %v238
  %259 = vmatprep.subr.bf16.mxu0 0
  %260 = vmatpush2.bf16.msra.mxu0 0
  %261 = vmatprep.subr.bf16.mxu0 0
  %262 = vmatpush2.bf16.msra.mxu0 0
  %263 = vmatprep.subr.bf16.mxu0 0
  %264 = vmatpush2.bf16.msra.mxu0 0
  %265 = vmatprep.subr.bf16.mxu0 0
  %266 = vmatpush2.bf16.msra.mxu0 0
  %267 = vmatprep.subr.bf16.mxu0 0
  %268 = vmatpush2.bf16.msra.mxu0 0
  %269 = vmatprep.subr.bf16.mxu0 0
  %270 = vmatpush2.bf16.msra.mxu0 0
  %271 = vmatprep.subr.bf16.mxu0 0
  %272 = vmatpush2.bf16.msra.mxu0 0
  %273 = vmatprep.subr.bf16.mxu0 0
  %274 = vmatpush2.bf16.msra.mxu0 0
  %275 = vmatprep.mubr.bf16.mxu0 0
  %276 = vmatmul.mubr.bf16.gmra.mxu0 %v241
  %v277 = vpop.f32.mrf.mxu0
  %v278 = vadd.f32 0.0, %v277
  %v279 = vpop.f32.mrf.mxu0
  %v280 = vpop.f32.mrf.mxu0
  %v281 = vadd.f32 0.0, %v280
  %v282 = vpop.f32.mrf.mxu0
  %283 = vdwg.mxu0
  %v284 = vadd.f32 %v224, %v278
  %v285 = vadd.f32 %v225, %v281
  %v286 = vmax.f32 %v284, 0.0
  %v287 = vmax.f32 %v285, 0.0
  %v288 = vpack.c.bf16 %v287, %v286
  %v289 = vld [vmem:[%s5] sm:$0xf]
  %v290 = vld [vmem:[%s5 + $0x4] sm:$0xf]
  %v291 = vld [vmem:[%s6] sm:$0x1]
  %v293 = vlaneseq
  %v294 = vshrl.u32 %v293, 7
  %v295 = vsub.s32 0, %v294
  %v296 = vrot.slane %v291, %v295
  %v300 = vunpack.c.l.b16 %v289
  %v301 = vunpack.c.l.b16 %v290
  %v302 = vpack.c.b16 %v301, %v300
  %v305 = vsel %vm59, %v288, 0
  %307 = vmatprep.subr.bf16.mxu0 0
  %308 = vmatpush1.bf16.msra.mxu0 0
  %309 = vmatprep.subr.bf16.mxu0 0
  %310 = vmatpush1.bf16.msra.mxu0 0
  %311 = vmatprep.subr.bf16.mxu0 0
  %312 = vmatpush1.bf16.msra.mxu0 0
  %313 = vmatprep.subr.bf16.mxu0 0
  %314 = vmatpush1.bf16.msra.mxu0 0
  %315 = vmatprep.subr.bf16.mxu0 0
  %316 = vmatpush1.bf16.msra.mxu0 0
  %317 = vmatprep.subr.bf16.mxu0 0
  %318 = vmatpush1.bf16.msra.mxu0 0
  %319 = vmatprep.subr.bf16.mxu0 0
  %320 = vmatpush1.bf16.msra.mxu0 0
  %321 = vmatprep.subr.bf16.mxu0 0
  %322 = vmatpush1.bf16.msra.mxu0 %v302
  %323 = vmatprep.subr.bf16.mxu0 0
  %324 = vmatpush2.bf16.msra.mxu0 0
  %325 = vmatprep.subr.bf16.mxu0 0
  %326 = vmatpush2.bf16.msra.mxu0 0
  %327 = vmatprep.subr.bf16.mxu0 0
  %328 = vmatpush2.bf16.msra.mxu0 0
  %329 = vmatprep.subr.bf16.mxu0 0
  %330 = vmatpush2.bf16.msra.mxu0 0
  %331 = vmatprep.subr.bf16.mxu0 0
  %332 = vmatpush2.bf16.msra.mxu0 0
  %333 = vmatprep.subr.bf16.mxu0 0
  %334 = vmatpush2.bf16.msra.mxu0 0
  %335 = vmatprep.subr.bf16.mxu0 0
  %336 = vmatpush2.bf16.msra.mxu0 0
  %337 = vmatprep.subr.bf16.mxu0 0
  %338 = vmatpush2.bf16.msra.mxu0 0
  %339 = vmatprep.mubr.bf16.mxu0 0
  %340 = vmatmul.mubr.bf16.gmra.mxu0 %v305
  %v341 = vpop.f32.mrf.mxu0
  %v342 = vadd.f32 %v296, %v341
  %v343 = vpop.f32.mrf.mxu0
  %v344 = vpop.f32.mrf.mxu0
  %v345 = vadd.f32 %v296, %v344
  %v346 = vpop.f32.mrf.mxu0
  %347 = vdwg.mxu0
  %348 = vmatprep.subr.bf16.mxu0 0
  %349 = vmatpush1.bf16.msra.mxu0 0
  %350 = vmatprep.subr.bf16.mxu0 0
  %351 = vmatpush1.bf16.msra.mxu0 0
  %352 = vmatprep.subr.bf16.mxu0 0
  %353 = vmatpush1.bf16.msra.mxu0 0
  %354 = vmatprep.subr.bf16.mxu0 0
  %355 = vmatpush1.bf16.msra.mxu0 0
  %356 = vmatprep.subr.bf16.mxu0 0
  %357 = vmatpush1.bf16.msra.mxu0 0
  %358 = vmatprep.subr.bf16.mxu0 0
  %359 = vmatpush1.bf16.msra.mxu0 0
  %360 = vmatprep.subr.bf16.mxu0 0
  %361 = vmatpush1.bf16.msra.mxu0 0
  %362 = vmatprep.subr.bf16.mxu0 0
  %363 = vmatpush1.bf16.msra.mxu0 %v288
  %364 = vmatprep.subr.bf16.mxu0 0
  %365 = vmatpush2.bf16.msra.mxu0 0
  %366 = vmatprep.subr.bf16.mxu0 0
  %367 = vmatpush2.bf16.msra.mxu0 0
  %368 = vmatprep.subr.bf16.mxu0 0
  %369 = vmatpush2.bf16.msra.mxu0 0
  %370 = vmatprep.subr.bf16.mxu0 0
  %371 = vmatpush2.bf16.msra.mxu0 0
  %372 = vmatprep.subr.bf16.mxu0 0
  %373 = vmatpush2.bf16.msra.mxu0 0
  %374 = vmatprep.subr.bf16.mxu0 0
  %375 = vmatpush2.bf16.msra.mxu0 0
  %376 = vmatprep.subr.bf16.mxu0 0
  %377 = vmatpush2.bf16.msra.mxu0 0
  %378 = vmatprep.subr.bf16.mxu0 0
  %379 = vmatpush2.bf16.msra.mxu0 0
  %380 = vmatprep.mubr.bf16.mxu0 0
  %381 = vmatmul.mubr.bf16.gmra.mxu0 %v61
  %v382 = vpop.f32.mrf.mxu0
  %v383 = vadd.f32 0.0, %v382
  %v384 = vpop.f32.mrf.mxu0
  %v385 = vpop.f32.mrf.mxu0
  %v386 = vadd.f32 0.0, %v385
  %v387 = vpop.f32.mrf.mxu0
  %388 = vdwg.mxu0
  %v389 = vpack.c.bf16 %v386, %v383
  %v390 = vld [vmem:[%s4] sm:$0xf]
  %v391 = vld [vmem:[%s4 + $0x4] sm:$0xf]
  %v394 = vunpack.c.l.b16 %v390
  %v395 = vunpack.c.l.b16 %v391
  %v396 = vpack.c.b16 %v395, %v394
  %v399 = vsel %vm59, %v389, 0
  %401 = vmatprep.subr.bf16.mxu0 0
  %402 = vmatpush1.bf16.msra.mxu0 0
  %403 = vmatprep.subr.bf16.mxu0 0
  %404 = vmatpush1.bf16.msra.mxu0 0
  %405 = vmatprep.subr.bf16.mxu0 0
  %406 = vmatpush1.bf16.msra.mxu0 0
  %407 = vmatprep.subr.bf16.mxu0 0
  %408 = vmatpush1.bf16.msra.mxu0 0
  %409 = vmatprep.subr.bf16.mxu0 0
  %410 = vmatpush1.bf16.msra.mxu0 0
  %411 = vmatprep.subr.bf16.mxu0 0
  %412 = vmatpush1.bf16.msra.mxu0 0
  %413 = vmatprep.subr.bf16.mxu0 0
  %414 = vmatpush1.bf16.msra.mxu0 0
  %415 = vmatprep.subr.bf16.mxu0 0
  %416 = vmatpush1.bf16.msra.mxu0 %v396
  %417 = vmatprep.subr.bf16.mxu0 0
  %418 = vmatpush2.bf16.msra.mxu0 0
  %419 = vmatprep.subr.bf16.mxu0 0
  %420 = vmatpush2.bf16.msra.mxu0 0
  %421 = vmatprep.subr.bf16.mxu0 0
  %422 = vmatpush2.bf16.msra.mxu0 0
  %423 = vmatprep.subr.bf16.mxu0 0
  %424 = vmatpush2.bf16.msra.mxu0 0
  %425 = vmatprep.subr.bf16.mxu0 0
  %426 = vmatpush2.bf16.msra.mxu0 0
  %427 = vmatprep.subr.bf16.mxu0 0
  %428 = vmatpush2.bf16.msra.mxu0 0
  %429 = vmatprep.subr.bf16.mxu0 0
  %430 = vmatpush2.bf16.msra.mxu0 0
  %431 = vmatprep.subr.bf16.mxu0 0
  %432 = vmatpush2.bf16.msra.mxu0 0
  %433 = vmatprep.mubr.bf16.mxu0 0
  %434 = vmatmul.mubr.bf16.gmra.mxu0 %v399
  %v435 = vpop.f32.mrf.mxu0
  %v436 = vadd.f32 0.0, %v435
  %v437 = vpop.f32.mrf.mxu0
  %v438 = vpop.f32.mrf.mxu0
  %v439 = vadd.f32 0.0, %v438
  %v440 = vpop.f32.mrf.mxu0
  %441 = vdwg.mxu0
  %v442 = vadd.f32 %v342, %v436
  %v443 = vadd.f32 %v345, %v439
  %444 = vmatprep.subr.bf16.mxu0 0
  %445 = vmatpush1.bf16.msra.mxu0 0
  %446 = vmatprep.subr.bf16.mxu0 0
  %447 = vmatpush1.bf16.msra.mxu0 0
  %448 = vmatprep.subr.bf16.mxu0 0
  %449 = vmatpush1.bf16.msra.mxu0 0
  %450 = vmatprep.subr.bf16.mxu0 0
  %451 = vmatpush1.bf16.msra.mxu0 0
  %452 = vmatprep.subr.bf16.mxu0 0
  %453 = vmatpush1.bf16.msra.mxu0 0
  %454 = vmatprep.subr.bf16.mxu0 0
  %455 = vmatpush1.bf16.msra.mxu0 0
  %456 = vmatprep.subr.bf16.mxu0 0
  %457 = vmatpush1.bf16.msra.mxu0 0
  %458 = vmatprep.subr.bf16.mxu0 0
  %459 = vmatpush1.bf16.msra.mxu0 %v288
  %460 = vmatprep.subr.bf16.mxu0 0
  %461 = vmatpush2.bf16.msra.mxu0 0
  %462 = vmatprep.subr.bf16.mxu0 0
  %463 = vmatpush2.bf16.msra.mxu0 0
  %464 = vmatprep.subr.bf16.mxu0 0
  %465 = vmatpush2.bf16.msra.mxu0 0
  %466 = vmatprep.subr.bf16.mxu0 0
  %467 = vmatpush2.bf16.msra.mxu0 0
  %468 = vmatprep.subr.bf16.mxu0 0
  %469 = vmatpush2.bf16.msra.mxu0 0
  %470 = vmatprep.subr.bf16.mxu0 0
  %471 = vmatpush2.bf16.msra.mxu0 0
  %472 = vmatprep.subr.bf16.mxu0 0
  %473 = vmatpush2.bf16.msra.mxu0 0
  %474 = vmatprep.subr.bf16.mxu0 0
  %475 = vmatpush2.bf16.msra.mxu0 0
  %476 = vmatprep.mubr.bf16.mxu0 0
  %477 = vmatmul.mubr.bf16.gmra.mxu0 %v121
  %v478 = vpop.f32.mrf.mxu0
  %v479 = vadd.f32 0.0, %v478
  %v480 = vpop.f32.mrf.mxu0
  %v481 = vpop.f32.mrf.mxu0
  %v482 = vadd.f32 0.0, %v481
  %v483 = vpop.f32.mrf.mxu0
  %484 = vdwg.mxu0
  %v485 = vpack.c.bf16 %v482, %v479
  %s486 = scalar_lea.vmem %s4, 8
  %v487 = vld [vmem:[%s486] sm:$0xf]
  %v488 = vld [vmem:[%s486 + $0x4] sm:$0xf]
  %v491 = vunpack.c.l.b16 %v487
  %v492 = vunpack.c.l.b16 %v488
  %v493 = vpack.c.b16 %v492, %v491
  %v496 = vsel %vm59, %v485, 0
  %498 = vmatprep.subr.bf16.mxu0 0
  %499 = vmatpush1.bf16.msra.mxu0 0
  %500 = vmatprep.subr.bf16.mxu0 0
  %501 = vmatpush1.bf16.msra.mxu0 0
  %502 = vmatprep.subr.bf16.mxu0 0
  %503 = vmatpush1.bf16.msra.mxu0 0
  %504 = vmatprep.subr.bf16.mxu0 0
  %505 = vmatpush1.bf16.msra.mxu0 0
  %506 = vmatprep.subr.bf16.mxu0 0
  %507 = vmatpush1.bf16.msra.mxu0 0
  %508 = vmatprep.subr.bf16.mxu0 0
  %509 = vmatpush1.bf16.msra.mxu0 0
  %510 = vmatprep.subr.bf16.mxu0 0
  %511 = vmatpush1.bf16.msra.mxu0 0
  %512 = vmatprep.subr.bf16.mxu0 0
  %513 = vmatpush1.bf16.msra.mxu0 %v493
  %514 = vmatprep.subr.bf16.mxu0 0
  %515 = vmatpush2.bf16.msra.mxu0 0
  %516 = vmatprep.subr.bf16.mxu0 0
  %517 = vmatpush2.bf16.msra.mxu0 0
  %518 = vmatprep.subr.bf16.mxu0 0
  %519 = vmatpush2.bf16.msra.mxu0 0
  %520 = vmatprep.subr.bf16.mxu0 0
  %521 = vmatpush2.bf16.msra.mxu0 0
  %522 = vmatprep.subr.bf16.mxu0 0
  %523 = vmatpush2.bf16.msra.mxu0 0
  %524 = vmatprep.subr.bf16.mxu0 0
  %525 = vmatpush2.bf16.msra.mxu0 0
  %526 = vmatprep.subr.bf16.mxu0 0
  %527 = vmatpush2.bf16.msra.mxu0 0
  %528 = vmatprep.subr.bf16.mxu0 0
  %529 = vmatpush2.bf16.msra.mxu0 0
  %530 = vmatprep.mubr.bf16.mxu0 0
  %531 = vmatmul.mubr.bf16.gmra.mxu0 %v496
  %v532 = vpop.f32.mrf.mxu0
  %v533 = vadd.f32 0.0, %v532
  %v534 = vpop.f32.mrf.mxu0
  %v535 = vpop.f32.mrf.mxu0
  %v536 = vadd.f32 0.0, %v535
  %v537 = vpop.f32.mrf.mxu0
  %538 = vdwg.mxu0
  %v539 = vadd.f32 %v442, %v533
  %v540 = vadd.f32 %v443, %v536
  %541 = vmatprep.subr.bf16.mxu0 0
  %542 = vmatpush1.bf16.msra.mxu0 0
  %543 = vmatprep.subr.bf16.mxu0 0
  %544 = vmatpush1.bf16.msra.mxu0 0
  %545 = vmatprep.subr.bf16.mxu0 0
  %546 = vmatpush1.bf16.msra.mxu0 0
  %547 = vmatprep.subr.bf16.mxu0 0
  %548 = vmatpush1.bf16.msra.mxu0 0
  %549 = vmatprep.subr.bf16.mxu0 0
  %550 = vmatpush1.bf16.msra.mxu0 0
  %551 = vmatprep.subr.bf16.mxu0 0
  %552 = vmatpush1.bf16.msra.mxu0 0
  %553 = vmatprep.subr.bf16.mxu0 0
  %554 = vmatpush1.bf16.msra.mxu0 0
  %555 = vmatprep.subr.bf16.mxu0 0
  %556 = vmatpush1.bf16.msra.mxu0 %v288
  %557 = vmatprep.subr.bf16.mxu0 0
  %558 = vmatpush2.bf16.msra.mxu0 0
  %559 = vmatprep.subr.bf16.mxu0 0
  %560 = vmatpush2.bf16.msra.mxu0 0
  %561 = vmatprep.subr.bf16.mxu0 0
  %562 = vmatpush2.bf16.msra.mxu0 0
  %563 = vmatprep.subr.bf16.mxu0 0
  %564 = vmatpush2.bf16.msra.mxu0 0
  %565 = vmatprep.subr.bf16.mxu0 0
  %566 = vmatpush2.bf16.msra.mxu0 0
  %567 = vmatprep.subr.bf16.mxu0 0
  %568 = vmatpush2.bf16.msra.mxu0 0
  %569 = vmatprep.subr.bf16.mxu0 0
  %570 = vmatpush2.bf16.msra.mxu0 0
  %571 = vmatprep.subr.bf16.mxu0 0
  %572 = vmatpush2.bf16.msra.mxu0 0
  %573 = vmatprep.mubr.bf16.mxu0 0
  %574 = vmatmul.mubr.bf16.gmra.mxu0 %v181
  %v575 = vpop.f32.mrf.mxu0
  %v576 = vadd.f32 0.0, %v575
  %v577 = vpop.f32.mrf.mxu0
  %v578 = vpop.f32.mrf.mxu0
  %v579 = vadd.f32 0.0, %v578
  %v580 = vpop.f32.mrf.mxu0
  %581 = vdwg.mxu0
  %v582 = vpack.c.bf16 %v579, %v576
  %s583 = scalar_lea.vmem %s4, 16
  %v584 = vld [vmem:[%s583] sm:$0xf]
  %v585 = vld [vmem:[%s583 + $0x4] sm:$0xf]
  %v588 = vunpack.c.l.b16 %v584
  %v589 = vunpack.c.l.b16 %v585
  %v590 = vpack.c.b16 %v589, %v588
  %v593 = vsel %vm59, %v582, 0
  %595 = vmatprep.subr.bf16.mxu0 0
  %596 = vmatpush1.bf16.msra.mxu0 0
  %597 = vmatprep.subr.bf16.mxu0 0
  %598 = vmatpush1.bf16.msra.mxu0 0
  %599 = vmatprep.subr.bf16.mxu0 0
  %600 = vmatpush1.bf16.msra.mxu0 0
  %601 = vmatprep.subr.bf16.mxu0 0
  %602 = vmatpush1.bf16.msra.mxu0 0
  %603 = vmatprep.subr.bf16.mxu0 0
  %604 = vmatpush1.bf16.msra.mxu0 0
  %605 = vmatprep.subr.bf16.mxu0 0
  %606 = vmatpush1.bf16.msra.mxu0 0
  %607 = vmatprep.subr.bf16.mxu0 0
  %608 = vmatpush1.bf16.msra.mxu0 0
  %609 = vmatprep.subr.bf16.mxu0 0
  %610 = vmatpush1.bf16.msra.mxu0 %v590
  %611 = vmatprep.subr.bf16.mxu0 0
  %612 = vmatpush2.bf16.msra.mxu0 0
  %613 = vmatprep.subr.bf16.mxu0 0
  %614 = vmatpush2.bf16.msra.mxu0 0
  %615 = vmatprep.subr.bf16.mxu0 0
  %616 = vmatpush2.bf16.msra.mxu0 0
  %617 = vmatprep.subr.bf16.mxu0 0
  %618 = vmatpush2.bf16.msra.mxu0 0
  %619 = vmatprep.subr.bf16.mxu0 0
  %620 = vmatpush2.bf16.msra.mxu0 0
  %621 = vmatprep.subr.bf16.mxu0 0
  %622 = vmatpush2.bf16.msra.mxu0 0
  %623 = vmatprep.subr.bf16.mxu0 0
  %624 = vmatpush2.bf16.msra.mxu0 0
  %625 = vmatprep.subr.bf16.mxu0 0
  %626 = vmatpush2.bf16.msra.mxu0 0
  %627 = vmatprep.mubr.bf16.mxu0 0
  %628 = vmatmul.mubr.bf16.gmra.mxu0 %v593
  %v629 = vpop.f32.mrf.mxu0
  %v630 = vadd.f32 0.0, %v629
  %v631 = vpop.f32.mrf.mxu0
  %v632 = vpop.f32.mrf.mxu0
  %v633 = vadd.f32 0.0, %v632
  %v634 = vpop.f32.mrf.mxu0
  %635 = vdwg.mxu0
  %v636 = vadd.f32 %v539, %v630
  %v637 = vadd.f32 %v540, %v633
  %638 = vmatprep.subr.bf16.mxu0 0
  %639 = vmatpush1.bf16.msra.mxu0 0
  %640 = vmatprep.subr.bf16.mxu0 0
  %641 = vmatpush1.bf16.msra.mxu0 0
  %642 = vmatprep.subr.bf16.mxu0 0
  %643 = vmatpush1.bf16.msra.mxu0 0
  %644 = vmatprep.subr.bf16.mxu0 0
  %645 = vmatpush1.bf16.msra.mxu0 0
  %646 = vmatprep.subr.bf16.mxu0 0
  %647 = vmatpush1.bf16.msra.mxu0 0
  %648 = vmatprep.subr.bf16.mxu0 0
  %649 = vmatpush1.bf16.msra.mxu0 0
  %650 = vmatprep.subr.bf16.mxu0 0
  %651 = vmatpush1.bf16.msra.mxu0 0
  %652 = vmatprep.subr.bf16.mxu0 0
  %653 = vmatpush1.bf16.msra.mxu0 %v288
  %654 = vmatprep.subr.bf16.mxu0 0
  %655 = vmatpush2.bf16.msra.mxu0 0
  %656 = vmatprep.subr.bf16.mxu0 0
  %657 = vmatpush2.bf16.msra.mxu0 0
  %658 = vmatprep.subr.bf16.mxu0 0
  %659 = vmatpush2.bf16.msra.mxu0 0
  %660 = vmatprep.subr.bf16.mxu0 0
  %661 = vmatpush2.bf16.msra.mxu0 0
  %662 = vmatprep.subr.bf16.mxu0 0
  %663 = vmatpush2.bf16.msra.mxu0 0
  %664 = vmatprep.subr.bf16.mxu0 0
  %665 = vmatpush2.bf16.msra.mxu0 0
  %666 = vmatprep.subr.bf16.mxu0 0
  %667 = vmatpush2.bf16.msra.mxu0 0
  %668 = vmatprep.subr.bf16.mxu0 0
  %669 = vmatpush2.bf16.msra.mxu0 0
  %670 = vmatprep.mubr.bf16.mxu0 0
  %671 = vmatmul.mubr.bf16.gmra.mxu0 %v241
  %v672 = vpop.f32.mrf.mxu0
  %v673 = vadd.f32 0.0, %v672
  %v674 = vpop.f32.mrf.mxu0
  %v675 = vpop.f32.mrf.mxu0
  %v676 = vadd.f32 0.0, %v675
  %v677 = vpop.f32.mrf.mxu0
  %678 = vdwg.mxu0
  %v679 = vpack.c.bf16 %v676, %v673
  %s680 = scalar_lea.vmem %s4, 24
  %v681 = vld [vmem:[%s680] sm:$0xf]
  %v682 = vld [vmem:[%s680 + $0x4] sm:$0xf]
  %v685 = vunpack.c.l.b16 %v681
  %v686 = vunpack.c.l.b16 %v682
  %v687 = vpack.c.b16 %v686, %v685
  %v690 = vsel %vm59, %v679, 0
  %692 = vmatprep.subr.bf16.mxu0 0
  %693 = vmatpush1.bf16.msra.mxu0 0
  %694 = vmatprep.subr.bf16.mxu0 0
  %695 = vmatpush1.bf16.msra.mxu0 0
  %696 = vmatprep.subr.bf16.mxu0 0
  %697 = vmatpush1.bf16.msra.mxu0 0
  %698 = vmatprep.subr.bf16.mxu0 0
  %699 = vmatpush1.bf16.msra.mxu0 0
  %700 = vmatprep.subr.bf16.mxu0 0
  %701 = vmatpush1.bf16.msra.mxu0 0
  %702 = vmatprep.subr.bf16.mxu0 0
  %703 = vmatpush1.bf16.msra.mxu0 0
  %704 = vmatprep.subr.bf16.mxu0 0
  %705 = vmatpush1.bf16.msra.mxu0 0
  %706 = vmatprep.subr.bf16.mxu0 0
  %707 = vmatpush1.bf16.msra.mxu0 %v687
  %708 = vmatprep.subr.bf16.mxu0 0
  %709 = vmatpush2.bf16.msra.mxu0 0
  %710 = vmatprep.subr.bf16.mxu0 0
  %711 = vmatpush2.bf16.msra.mxu0 0
  %712 = vmatprep.subr.bf16.mxu0 0
  %713 = vmatpush2.bf16.msra.mxu0 0
  %714 = vmatprep.subr.bf16.mxu0 0
  %715 = vmatpush2.bf16.msra.mxu0 0
  %716 = vmatprep.subr.bf16.mxu0 0
  %717 = vmatpush2.bf16.msra.mxu0 0
  %718 = vmatprep.subr.bf16.mxu0 0
  %719 = vmatpush2.bf16.msra.mxu0 0
  %720 = vmatprep.subr.bf16.mxu0 0
  %721 = vmatpush2.bf16.msra.mxu0 0
  %722 = vmatprep.subr.bf16.mxu0 0
  %723 = vmatpush2.bf16.msra.mxu0 0
  %724 = vmatprep.mubr.bf16.mxu0 0
  %725 = vmatmul.mubr.bf16.gmra.mxu0 %v690
  %v726 = vpop.f32.mrf.mxu0
  %v727 = vadd.f32 0.0, %v726
  %v728 = vpop.f32.mrf.mxu0
  %v729 = vpop.f32.mrf.mxu0
  %v730 = vadd.f32 0.0, %v729
  %v731 = vpop.f32.mrf.mxu0
  %732 = vdwg.mxu0
  %v733 = vadd.f32 %v636, %v727
  %v734 = vadd.f32 %v637, %v730
  %735 = vmax.xlane.f32.xlu0 %v733
  %v736 = vpop.xlane.xlu0 %735
  %737 = vmax.xlane.f32.xlu0 %v734
  %v738 = vpop.xlane.xlu0 %737
  %v739 = vsub.f32 %v733, %v736
  %v740 = vsub.f32 %v734, %v738
  %v741 = vmul.f32 %v739, 1.442695
  %v742 = vpow.pop %v741
  %v743 = vmul.f32 %v740, 1.442695
  %v744 = vpow.pop %v743
  %745 = vadd.xlane.f32.xlu0 %v742
  %v746 = vpop.xlane.xlu0 %745
  %747 = vadd.xlane.f32.xlu0 %v744
  %v748 = vpop.xlane.xlu0 %747
  %v749 = vlog2.pop %v746
  %v750 = vmul.f32 %v749, 0.6931472
  %v751 = vlog2.pop %v748
  %v752 = vmul.f32 %v751, 0.6931472
  %v753 = vsub.f32 %v739, %v750
  %v754 = vsub.f32 %v740, %v752
  %755 = vst [vmem:[%s7] sm:$0xff] %v753
  %756 = vst [vmem:[%s7 + $0x8] sm:$0xff] %v754
  // Predicated region
  $region30: #{rgcn_forward.1} parent=0 // pred_check
    _
  $region31: #{rgcn_forward.1} parent=0 // pred_check_branch
    %758 = sbr.rel (0) target = $region33
  $region32: #{rgcn_forward.1} parent=0 // pred_region
    _
  $region33: #{rgcn_forward.1} parent=0 // pred_fallthru
    _
  // Predicated region
  $region34: #{rgcn_forward.1} parent=0 // pred_check
    _
  $region35: #{rgcn_forward.1} parent=0 // pred_check_branch
    %760 = sbr.rel (0) target = $region37
  $region36: #{rgcn_forward.1} parent=0 // pred_region
    _
  $region37: #{rgcn_forward.1} parent=0 // pred_fallthru
    _

</llo_original>
